<compile_context>
chip_gen: v7x
topology: tpu7x:2x2x1
jax: 0.10.0
libtpu: 0.0.40
codegen_flags: <defaults>
</compile_context>

<pallas_src>
import jax
import jax.numpy as jnp
from jax import lax
from jax.experimental import pallas as pl
from jax.experimental.pallas import tpu as pltpu

NEG_SLOPE = 0.01   # nn.LeakyReLU default
BN_EPS = 1e-5      # nn.BatchNorm2d default


# ----------------------------------------------------------------------------- tile sizing


def _vmem_budget():
    """Generation-aware (vmem_limit_bytes, per-block budget in bytes)."""
    try:
        cap = int(pltpu.get_tpu_info().vmem_capacity_bytes)
    except Exception:
        cap = 64 << 20                       # conservative: v7x has 64 MiB per TensorCore
    vmem_limit = min((cap * 3) // 4, 96 << 20)   # ~96 MiB on v5e/v6e, ~48 MiB on v7x
    block_budget = vmem_limit // 8               # 2x in + 2x out (double-buffered) + temps
    return vmem_limit, block_budget


def _choose_channel_tile(N, C, HW, block_budget):
    """Channel tile for the single-pass kernel, or None if even the smallest tile won't fit.

    tc must be a multiple of 8 dividing C (sublane constraint) or C itself.  Prefer >=4
    (else >=2) grid steps so pipelining / megacore sharding have work, then the largest
    block that fits the budget.
    """
    row_bytes = N * HW * 4
    cands = [t for t in range(8, C + 1, 8) if C % t == 0]
    if C not in cands:
        cands.append(C)
    fitting = [t for t in cands if t * row_bytes <= block_budget]
    if not fitting:
        return None
    ge4 = [t for t in fitting if C // t >= 4]
    ge2 = [t for t in fitting if C // t >= 2]
    pool = ge4 or ge2 or fitting
    return max(pool)


def _choose_two_pass_tiles(N, C, HW, block_budget):
    """(tc, tn, thw) for the two-pass fallback.

    thw must be a multiple of 128 dividing HW (lane-dense) or HW itself; tn divides N;
    tc is the smallest legal channel tile.
    """
    tc = 8 if C % 8 == 0 else C
    thw_cands = sorted({HW} | {d for d in range(128, HW + 1, 128) if HW % d == 0},
                       reverse=True)
    tn_cands = sorted({d for d in range(1, N + 1) if N % d == 0}, reverse=True)
    best = None   # (score, tn, thw)
    for thw in thw_cands:
        for tn in tn_cands:
            if tn * tc * thw * 4 <= block_budget:
                score = (tn * thw, thw)
                if best is None or score > best[0]:
                    best = (score, tn, thw)
                break   # tn sorted descending -> first fit is the largest for this thw
    if best is None:
        # TODO(synk): pathological shape where nothing fits the budget; take the smallest
        # legal block and let the raised vmem_limit absorb it.
        return tc, 1, min(thw_cands)
    return tc, best[1], best[2]


# ----------------------------------------------------------------------------- single-pass


def _make_fused_kernel(tc, n_c, inv_count):
    def kernel(x_ref, gamma_ref, beta_ref, o_ref):
        # x_ref: (N, tc, HW) block; gamma_ref/beta_ref: full (C, 1), resident in VMEM.
        if n_c == 1:
            g = gamma_ref[...]
            b = beta_ref[...]
        else:
            off = pl.multiple_of(pl.program_id(0) * tc, tc)
            g = gamma_ref[pl.ds(off, tc), :]
            b = beta_ref[pl.ds(off, tc), :]

        x = x_ref[...]
        y = jnp.where(x > 0, x, NEG_SLOPE * x)                       # LeakyReLU first

        # Batch stats: reduce N with VPU adds, then one XLU lane-reduce per channel row.
        mean = jnp.sum(jnp.sum(y, axis=0), axis=-1, keepdims=True) * inv_count     # (tc, 1)

        # Stage centered activations through the output block: saves one block-sized temp
        # and keeps the numerically-safer centered variance.
        o_ref[...] = y - mean[None, :, :]
        c = o_ref[...]
        var = jnp.sum(jnp.sum(c * c, axis=0), axis=-1, keepdims=True) * inv_count  # (tc, 1)

        scale = lax.rsqrt(var + BN_EPS) * g                                        # (tc, 1)
        o_ref[...] = c * scale[None, :, :] + b[None, :, :]
    return kernel


def _single_pass(x_f, gamma_c1, beta_c1, N, C, HW, tc, vmem_limit):
    n_c = C // tc
    kernel = _make_fused_kernel(tc, n_c, 1.0 / float(N * HW))
    return pl.pallas_call(
        kernel,
        out_shape=jax.ShapeDtypeStruct((N, C, HW), jnp.float32),
        grid=(n_c,),
        in_specs=[
            pl.BlockSpec((N, tc, HW), lambda ci: (0, ci, 0)),
            pl.BlockSpec((C, 1), lambda ci: (0, 0)),   # constant block index -> DMA'd once
            pl.BlockSpec((C, 1), lambda ci: (0, 0)),
        ],
        out_specs=pl.BlockSpec((N, tc, HW), lambda ci: (0, ci, 0)),
        compiler_params=pltpu.CompilerParams(
            dimension_semantics=("parallel",),
            vmem_limit_bytes=vmem_limit,
        ),
        cost_estimate=pl.CostEstimate(
            flops=10 * N * C * HW, transcendentals=C, bytes_accessed=8 * N * C * HW),
    )(x_f, gamma_c1, beta_c1)


# ----------------------------------------------------------------------------- two-pass


def _stats_kernel(x_ref, sum_ref, sumsq_ref):
    # Per-channel sum / sum-of-squares of LeakyReLU(x), accumulated over the (N, HW) axes.
    @pl.when((pl.program_id(1) == 0) & (pl.program_id(2) == 0))
    def _():
        sum_ref[...] = jnp.zeros_like(sum_ref)
        sumsq_ref[...] = jnp.zeros_like(sumsq_ref)

    x = x_ref[...]
    y = jnp.where(x > 0, x, NEG_SLOPE * x)
    sum_ref[...] += jnp.sum(jnp.sum(y, axis=0), axis=-1, keepdims=True)
    sumsq_ref[...] += jnp.sum(jnp.sum(y * y, axis=0), axis=-1, keepdims=True)


def _apply_kernel(x_ref, scale_ref, shift_ref, o_ref):
    x = x_ref[...]
    y = jnp.where(x > 0, x, NEG_SLOPE * x)
    o_ref[...] = y * scale_ref[...][None, :, :] + shift_ref[...][None, :, :]


def _two_pass(x_f, gamma_c1, beta_c1, N, C, HW, block_budget, vmem_limit):
    tc, tn, thw = _choose_two_pass_tiles(N, C, HW, block_budget)
    n_c, n_n, n_hw = C // tc, N // tn, HW // thw
    grid = (n_c, n_n, n_hw)

    x_spec = pl.BlockSpec((tn, tc, thw), lambda ci, ni, hi: (ni, ci, hi))
    stat_spec = pl.BlockSpec((tc, 1), lambda ci, ni, hi: (ci, 0))

    sums, sumsqs = pl.pallas_call(
        _stats_kernel,
        out_shape=(jax.ShapeDtypeStruct((C, 1), jnp.float32),
                   jax.ShapeDtypeStruct((C, 1), jnp.float32)),
        grid=grid,
        in_specs=[x_spec],
        out_specs=(stat_spec, stat_spec),
        compiler_params=pltpu.CompilerParams(
            dimension_semantics=("parallel", "arbitrary", "arbitrary"),
            vmem_limit_bytes=vmem_limit,
        ),
        cost_estimate=pl.CostEstimate(
            flops=5 * N * C * HW, transcendentals=0, bytes_accessed=4 * N * C * HW),
    )(x_f)

    cnt = float(N * HW)
    mean = sums / cnt
    # TODO(synk): E[y^2] - mean^2 can lose precision when |mean| >> std; the single-pass path
    # keeps the centered form, this large-tensor fallback accepts the tradeoff to stay 2R+1W.
    var = jnp.maximum(sumsqs / cnt - mean * mean, 0.0)
    scale = lax.rsqrt(var + BN_EPS) * gamma_c1            # (C, 1)
    shift = beta_c1 - mean * scale

    return pl.pallas_call(
        _apply_kernel,
        out_shape=jax.ShapeDtypeStruct((N, C, HW), jnp.float32),
        grid=grid,
        in_specs=[x_spec, stat_spec, stat_spec],
        out_specs=x_spec,
        compiler_params=pltpu.CompilerParams(
            dimension_semantics=("parallel", "parallel", "parallel"),
            vmem_limit_bytes=vmem_limit,
        ),
        cost_estimate=pl.CostEstimate(
            flops=4 * N * C * HW, transcendentals=0, bytes_accessed=8 * N * C * HW),
    )(x_f, scale, shift)


# ----------------------------------------------------------------------------- wrapper


def batch_act_forward(x_nchw, gamma, beta, *, force_two_pass=False,
                      block_budget_override=None):
    """Forward of batch_act: LeakyReLU then training-mode BatchNorm2d (batch statistics)."""
    N, C, H, W = x_nchw.shape
    HW = H * W

    x_f = x_nchw.astype(jnp.float32).reshape(N, C, HW)    # free metadata reshape, NCHW kept
    gamma_c1 = gamma.reshape(C, 1).astype(jnp.float32)
    beta_c1 = beta.reshape(C, 1).astype(jnp.float32)

    vmem_limit, block_budget = _vmem_budget()
    if block_budget_override is not None:
        block_budget = block_budget_override

    tc = None if force_two_pass else _choose_channel_tile(N, C, HW, block_budget)
    if tc is not None:
        out = _single_pass(x_f, gamma_c1, beta_c1, N, C, HW, tc, vmem_limit)
    else:
        out = _two_pass(x_f, gamma_c1, beta_c1, N, C, HW, block_budget, vmem_limit)

    # TODO(synk): training-mode BatchNorm2d also updates running_mean/running_var (unbiased
    # variance, momentum); emit mean/var as extra outputs if module-state parity is needed.
    # TODO(synk): for HW not a multiple of 128 the stores are lane-masked; padding HW in the
    # wrapper would make them dense at the cost of an extra XLA pad pass.
    return out.reshape(N, C, H, W)


# ----------------------------------------------------------------------------- demo / check


def _reference(x, gamma, beta):
    C = x.shape[1]
    y = jnp.where(x > 0, x, NEG_SLOPE * x)
    mean = jnp.mean(y, axis=(0, 2, 3), keepdims=True)
    var = jnp.mean((y - mean) ** 2, axis=(0, 2, 3), keepdims=True)
    return ((y - mean) / jnp.sqrt(var + BN_EPS) * gamma.reshape(1, C, 1, 1)
            + beta.reshape(1, C, 1, 1))


if __name__ == "__main__":
    key = jax.random.PRNGKey(0)
    N, C, H, W = 2, 4, 16, 16
    x = jax.random.normal(key, (N, C, H, W), dtype=jnp.float32)
    gamma = 1.0 + 0.1 * jnp.arange(C, dtype=jnp.float32)   # BN init is (1, 0); perturb affine
    beta = 0.01 * jnp.arange(C, dtype=jnp.float32)

    ref = _reference(x, gamma, beta)

    out = batch_act_forward(x, gamma, beta)                 # single-pass path
    jax.block_until_ready(out)
    assert jnp.max(jnp.abs(out - ref)) < 1e-4, "single-pass mismatch vs reference"

    # Also exercise the two-pass (accumulate-then-normalize) fallback with a tiny block
    # budget so both reduction grid axes actually tile.
    out2 = batch_act_forward(x, gamma, beta, force_two_pass=True,
                             block_budget_override=2048)
    jax.block_until_ready(out2)
    assert jnp.max(jnp.abs(out2 - ref)) < 1e-4, "two-pass mismatch vs reference"

    print("KERNEL_OK")
</pallas_src>

<mosaic_0001>
module attributes {stable_mosaic.version = 11 : i64} {
  func.func @kernel(%arg0: i32, %arg1: memref<2x4x256xf32, #tpu.memory_space<vmem>>, %arg2: memref<4x1xf32, #tpu.memory_space<vmem>>, %arg3: memref<4x1xf32, #tpu.memory_space<vmem>>, %arg4: memref<2x4x256xf32, #tpu.memory_space<vmem>>) attributes {dimension_semantics = [#tpu.dimension_semantics<parallel>], iteration_bounds = array<i64: 1>, scalar_prefetch = 0 : i64, scratch_operands = 0 : i64, tpu.core_type = #tpu.core_type<tc>, window_params = [{transform_indices = @transform_0, window_bounds = array<i64: 2, 4, 256>}, {pipeline_mode = #tpu.pipeline_mode<synchronous>, transform_indices = @transform_1, window_bounds = array<i64: 4, 1>}, {pipeline_mode = #tpu.pipeline_mode<synchronous>, transform_indices = @transform_2, window_bounds = array<i64: 4, 1>}, {transform_indices = @transform_3, window_bounds = array<i64: 2, 4, 256>}]} {
    %c0 = arith.constant 0 : index
    %c0_0 = arith.constant 0 : index
    %0 = vector.load %arg2[%c0, %c0_0] : memref<4x1xf32, #tpu.memory_space<vmem>>, vector<4x1xf32>
    %c0_1 = arith.constant 0 : index
    %c0_2 = arith.constant 0 : index
    %1 = vector.load %arg3[%c0_1, %c0_2] : memref<4x1xf32, #tpu.memory_space<vmem>>, vector<4x1xf32>
    %c0_3 = arith.constant 0 : index
    %c0_4 = arith.constant 0 : index
    %c0_5 = arith.constant 0 : index
    %2 = vector.load %arg1[%c0_3, %c0_4, %c0_5] : memref<2x4x256xf32, #tpu.memory_space<vmem>>, vector<2x4x256xf32>
    %cst = arith.constant 0.000000e+00 : f32
    %3 = vector.broadcast %cst : f32 to vector<2x4x256xf32>
    %4 = arith.cmpf ogt, %2, %3 : vector<2x4x256xf32>
    %cst_6 = arith.constant 0.00999999977 : f32
    %5 = vector.broadcast %cst_6 : f32 to vector<2x4x256xf32>
    %6 = arith.mulf %5, %2 : vector<2x4x256xf32>
    %7 = arith.select %4, %2, %6 : vector<2x4x256xi1>, vector<2x4x256xf32>
    %cst_7 = arith.constant dense<0.000000e+00> : vector<4x256xf32>
    %8 = vector.multi_reduction <add>, %7, %cst_7 [0] : vector<2x4x256xf32> to vector<4x256xf32>
    %cst_8 = arith.constant dense<0.000000e+00> : vector<4xf32>
    %9 = vector.multi_reduction <add>, %8, %cst_8 [1] : vector<4x256xf32> to vector<4xf32>
    %10 = vector.shape_cast %9 : vector<4xf32> to vector<4x1xf32>
    %cst_9 = arith.constant 0.001953125 : f32
    %11 = vector.broadcast %cst_9 : f32 to vector<4x1xf32>
    %12 = arith.mulf %10, %11 : vector<4x1xf32>
    %13 = vector.shape_cast %12 : vector<4x1xf32> to vector<1x4x1xf32>
    %14 = vector.broadcast %13 : vector<1x4x1xf32> to vector<2x4x256xf32>
    %15 = arith.subf %7, %14 : vector<2x4x256xf32>
    %c0_10 = arith.constant 0 : index
    %c0_11 = arith.constant 0 : index
    %c0_12 = arith.constant 0 : index
    %16 = vector.load %arg4[%c0_10, %c0_11, %c0_12] : memref<2x4x256xf32, #tpu.memory_space<vmem>>, vector<2x4x256xf32>
    tpu.vector_store %arg4[%c0_10, %c0_11, %c0_12], %15 {strides = array<i32>} : memref<2x4x256xf32, #tpu.memory_space<vmem>>, vector<2x4x256xf32>,
    %c0_13 = arith.constant 0 : index
    %c0_14 = arith.constant 0 : index
    %c0_15 = arith.constant 0 : index
    %17 = vector.load %arg4[%c0_13, %c0_14, %c0_15] : memref<2x4x256xf32, #tpu.memory_space<vmem>>, vector<2x4x256xf32>
    %18 = arith.mulf %17, %17 : vector<2x4x256xf32>
    %cst_16 = arith.constant dense<0.000000e+00> : vector<4x256xf32>
    %19 = vector.multi_reduction <add>, %18, %cst_16 [0] : vector<2x4x256xf32> to vector<4x256xf32>
    %cst_17 = arith.constant dense<0.000000e+00> : vector<4xf32>
    %20 = vector.multi_reduction <add>, %19, %cst_17 [1] : vector<4x256xf32> to vector<4xf32>
    %21 = vector.shape_cast %20 : vector<4xf32> to vector<4x1xf32>
    %cst_18 = arith.constant 0.001953125 : f32
    %22 = vector.broadcast %cst_18 : f32 to vector<4x1xf32>
    %23 = arith.mulf %21, %22 : vector<4x1xf32>
    %cst_19 = arith.constant 9.99999974E-6 : f32
    %24 = vector.broadcast %cst_19 : f32 to vector<4x1xf32>
    %25 = arith.addf %23, %24 : vector<4x1xf32>
    %26 = math.rsqrt %25 : vector<4x1xf32>
    %27 = arith.mulf %26, %0 : vector<4x1xf32>
    %28 = vector.shape_cast %27 : vector<4x1xf32> to vector<1x4x1xf32>
    %29 = vector.broadcast %28 : vector<1x4x1xf32> to vector<2x4x256xf32>
    %30 = arith.mulf %17, %29 : vector<2x4x256xf32>
    %31 = vector.shape_cast %1 : vector<4x1xf32> to vector<1x4x1xf32>
    %32 = vector.broadcast %31 : vector<1x4x1xf32> to vector<2x4x256xf32>
    %33 = arith.addf %30, %32 : vector<2x4x256xf32>
    %c0_20 = arith.constant 0 : index
    %c0_21 = arith.constant 0 : index
    %c0_22 = arith.constant 0 : index
    %34 = vector.load %arg4[%c0_20, %c0_21, %c0_22] : memref<2x4x256xf32, #tpu.memory_space<vmem>>, vector<2x4x256xf32>
    tpu.vector_store %arg4[%c0_20, %c0_21, %c0_22], %33 {strides = array<i32>} : memref<2x4x256xf32, #tpu.memory_space<vmem>>, vector<2x4x256xf32>,
    return
  }
  func.func @transform_0(%arg0: i32) -> (i32, i32, i32) {
    %c0_i32 = arith.constant 0 : i32
    %c0_i32_0 = arith.constant 0 : i32
    %c0_i32_1 = arith.constant 0 : i32
    return %c0_i32, %arg0, %c0_i32_0 : i32, i32, i32
  }
  func.func @transform_1(%arg0: i32) -> (i32, i32) {
    %c0_i32 = arith.constant 0 : i32
    %c0_i32_0 = arith.constant 0 : i32
    %c0_i32_1 = arith.constant 0 : i32
    return %c0_i32, %c0_i32_0 : i32, i32
  }
  func.func @transform_2(%arg0: i32) -> (i32, i32) {
    %c0_i32 = arith.constant 0 : i32
    %c0_i32_0 = arith.constant 0 : i32
    %c0_i32_1 = arith.constant 0 : i32
    return %c0_i32, %c0_i32_0 : i32, i32
  }
  func.func @transform_3(%arg0: i32) -> (i32, i32, i32) {
    %c0_i32 = arith.constant 0 : i32
    %c0_i32_0 = arith.constant 0 : i32
    %c0_i32_1 = arith.constant 0 : i32
    return %c0_i32, %arg0, %c0_i32_0 : i32, i32, i32
  }
}

</mosaic_0001>

<llo_original>
// kernel: tpu_custom_call.1
$region0: #{tpu_custom_call.1}
  #allocation0 [shape = 'u32[]', space=smem, size = 0x4, offset = 0x4, fixed_abs, tag = 'smem constant byte address 0x4 - core index']
  #allocation1 [shape = 'u32[144,128]{1,0:T(1,128)}', space=vmem, size = 0x12000, scoped, tag = 'internal scratch']
  %s0 = inlined_call_operand.hbm [shape: f32[2,4,256], index: 0, kind: input, shape index: {}]
  %s1 = inlined_call_operand.vmem [shape: f32[4,1], index: 1, kind: input, shape index: {}]
  %s2 = inlined_call_operand.vmem [shape: f32[4,1], index: 2, kind: input, shape index: {}]
  %s3 = inlined_call_operand.hbm [shape: f32[2,4,256], index: 3, kind: output, shape index: {}]
  %s4 = sld [smem:[#allocation0]]
  $region26: #{tpu_custom_call.1} parent=0
    _
  %s6 = ssub.s32 1, %s4
  %s7 = scalar_select 0, %s6, %s4
  $region1: #{tpu_custom_call.1} parent=0
    #allocation2 [shape = 'u8[8192]{0}', space=vmem, size = 0x2000, scoped, tag = 'input window, operand 0, single buffered']
    #allocation3 [shape = 's32[1]{0}', space=sflag, size = 0x4, scoped, tag = 'scoped memory for tpu_custom_call.1']
    #allocation4 [shape = 's32[1]{0}', space=sflag, size = 0x4, scoped, tag = 'scoped memory for tpu_custom_call.1']
    #allocation5 [shape = 'u8[8192]{0}', space=vmem, size = 0x2000, scoped, tag = 'output window, operand 0, single buffered']
    %8 = vsyncpa [#allocation3], 0
    %9 = vsyncpa [#allocation4], 0
    // Predicated region
    $region2: #{tpu_custom_call.1} parent=1 // pred_check
      _
    $region3: #{tpu_custom_call.1} parent=1 // pred_check_branch
      %11 = sbr.rel (0) target = $region5
    $region4: #{tpu_custom_call.1} parent=1 // pred_region
      %s13 = ssub.s32 256, 256
      %14 = vsyncadd [#allocation3], %s13
      %s15 = sshll.u32 [#allocation2], 4
      %s16 = int_to_ptr.vmem [resolvable:$true] %s15
      %21 = dma.hbm_to_vmem [thread:$0]  %s0, 256, %s16, [#allocation3], 128, 128, 8
    $region5: #{tpu_custom_call.1} parent=1 // pred_fallthru
      _
    // Predicated region
    $region6: #{tpu_custom_call.1} parent=1 // pred_check
      _
    $region7: #{tpu_custom_call.1} parent=1 // pred_check_branch
      %23 = sbr.rel (0) target = $region9
    $region8: #{tpu_custom_call.1} parent=1 // pred_region
      _
    $region9: #{tpu_custom_call.1} parent=1 // pred_fallthru
      _
    // Predicated region
    $region10: #{tpu_custom_call.1} parent=1 // pred_check
      _
    $region11: #{tpu_custom_call.1} parent=1 // pred_check_branch
      %25 = sbr.rel (0) target = $region13
    $region12: #{tpu_custom_call.1} parent=1 // pred_region
      _
    $region13: #{tpu_custom_call.1} parent=1 // pred_fallthru
      _
    // Predicated region
    $region14: #{tpu_custom_call.1} parent=1 // pred_check
      _
    $region15: #{tpu_custom_call.1} parent=1 // pred_check_branch
      %27 = sbr.rel (0) target = $region17
    $region16: #{tpu_custom_call.1} parent=1 // pred_region
      %28 = dma.done [#allocation3], 256
    $region17: #{tpu_custom_call.1} parent=1 // pred_fallthru
      _
    %v29 = vld [vmem:[%s1] sm:$0xf]
    %v30 = vld [vmem:[%s2] sm:$0xf]
    %v31 = vld [vmem:[#allocation2] sm:$0xff]
    %v32 = vld [vmem:[#allocation2 + $0x8] sm:$0xff]
    %vm33 = vcmp.gt.f32.partialorder %v31, 0.0
    %vm34 = vcmp.gt.f32.partialorder %v32, 0.0
    %v35 = vmul.f32 %v31, 0.01
    %v36 = vmul.f32 %v32, 0.01
    %v37 = vsel %vm33, %v31, %v35
    %v38 = vsel %vm34, %v32, %v36
    %v41 = vcombine.high %v37, %v37
    %v42 = vcombine.high %v38, %v38
    %vm45 = vcmask 1043456
    %v46 = vsel %vm45, %v37, 0.0
    %v47 = vsel %vm45, %v38, 0.0
    %v48 = vadd.f32 %v46, %v47
    %v49 = vsel %vm45, %v41, 0.0
    %v50 = vsel %vm45, %v42, 0.0
    %v51 = vadd.f32 %v49, %v50
    %v52 = vsel %vm45, %v48, 0.0
    %v53 = vsel %vm45, %v51, 0.0
    %v54 = vadd.f32 %v52, %v53
    %55 = vadd.xlane.f32.xlu0 %v54
    %v56 = vpop.xlane.xlu0 %55
    %v57 = vmul.f32 %v56, 0.001953125
    %v60 = vunpack.c.l.s4 839922192
    %v61 = vunpack.c.0.s8 %v60
    %v62 = vlaneseq
    %v63 = vshrl.u32 %v62, 7
    %v64 = vsub.s32 %v61, %v63
    %v65 = vrot.slane %v57, %v64
    %v67 = vsub.f32 %v37, %v65
    %v68 = vsub.f32 %v38, %v65
    %69 = vst [vmem:[#allocation5] sm:$0xff] %v67
    %70 = vst [vmem:[#allocation5 + $0x8] sm:$0xff] %v68
    %v71 = vld [vmem:[#allocation5] sm:$0xff]
    %v72 = vld [vmem:[#allocation5 + $0x8] sm:$0xff]
    %v73 = vmul.f32 %v71, %v71
    %v74 = vmul.f32 %v72, %v72
    %v77 = vcombine.high %v73, %v73
    %v78 = vcombine.high %v74, %v74
    %v81 = vsel %vm45, %v73, 0.0
    %v82 = vsel %vm45, %v74, 0.0
    %v83 = vadd.f32 %v81, %v82
    %v84 = vsel %vm45, %v77, 0.0
    %v85 = vsel %vm45, %v78, 0.0
    %v86 = vadd.f32 %v84, %v85
    %v87 = vsel %vm45, %v83, 0.0
    %v88 = vsel %vm45, %v86, 0.0
    %v89 = vadd.f32 %v87, %v88
    %90 = vadd.xlane.f32.xlu0 %v89
    %v91 = vpop.xlane.xlu0 %90
    %v92 = vmul.f32 %v91, 0.001953125
    %v93 = vadd.f32 %v92, 1e-05
    %v94 = vrsqrt.pop %v93
    %v95 = vmul.f32 %v94, %v29
    %97 = vset.pattern.permute.xlu0 0
    %98 = vperm.xlu0 %97, %v95
    %v99 = vpop.permute.xlu0 %98
    %v101 = vunpack.c.l.s4 839922192
    %v102 = vunpack.c.0.s8 %v101
    %v103 = vlaneseq
    %v104 = vshrl.u32 %v103, 7
    %v105 = vsub.s32 %v102, %v104
    %v106 = vrot.slane %v99, %v105
    %v108 = vmul.f32 %v71, %v106
    %v109 = vmul.f32 %v72, %v106
    %111 = vset.pattern.permute.xlu0 0
    %112 = vperm.xlu0 %111, %v30
    %v113 = vpop.permute.xlu0 %112
    %v115 = vunpack.c.l.s4 839922192
    %v116 = vunpack.c.0.s8 %v115
    %v117 = vlaneseq
    %v118 = vshrl.u32 %v117, 7
    %v119 = vsub.s32 %v116, %v118
    %v120 = vrot.slane %v113, %v119
    %v122 = vadd.f32 %v108, %v120
    %v123 = vadd.f32 %v109, %v120
    %124 = vst [vmem:[#allocation5] sm:$0xff] %v122
    %125 = vst [vmem:[#allocation5 + $0x8] sm:$0xff] %v123
    // Predicated region
    $region18: #{tpu_custom_call.1} parent=1 // pred_check
      _
    $region19: #{tpu_custom_call.1} parent=1 // pred_check_branch
      %127 = sbr.rel (0) target = $region21
    $region20: #{tpu_custom_call.1} parent=1 // pred_region
      %s129 = ssub.s32 256, 256
      %130 = vsyncadd [#allocation4], %s129
      %s131 = sshll.u32 [#allocation5], 4
      %s132 = int_to_ptr.vmem [resolvable:$true] %s131
      %137 = dma.vmem_to_hbm [thread:$0]  %s132, 256, %s3, [#allocation4], 128, 128, 8
    $region21: #{tpu_custom_call.1} parent=1 // pred_fallthru
      _
    // Predicated region
    $region22: #{tpu_custom_call.1} parent=1 // pred_check
      _
    $region23: #{tpu_custom_call.1} parent=1 // pred_check_branch
      %139 = sbr.rel (0) target = $region25
    $region24: #{tpu_custom_call.1} parent=1 // pred_region
      %140 = dma.done [#allocation4], 256
    $region25: #{tpu_custom_call.1} parent=1 // pred_fallthru
      _
    %141 = vsyncpa [#allocation3], 1
    %142 = vsyncpa [#allocation4], 1

</llo_original>
